<compile_context>
chip_gen: v7x
topology: tpu7x:2x2x1
jax: 0.10.0
libtpu: 0.0.40
codegen_flags: <defaults>
</compile_context>

<pallas_src>
import functools

import jax
import jax.numpy as jnp
from jax import lax
from jax.experimental import pallas as pl
from jax.experimental.pallas import tpu as pltpu


def simclr_kernel(s_ref, t_ref, out_ref, qn_sc, m_sc, l_sc, d_sc, *, inv_temp):
    """One grid step: (pair p, query row-tile i, key tile j).

    Online logsumexp (flash-attention style) over key tiles j; the diagonal
    logit (labels == arange) comes from a row-wise dot on the j == i tile.
    """
    i = pl.program_id(1)                      # query row-tile index
    j = pl.program_id(2)                      # key tile index (innermost / reduction)

    # ---- per-(pair, row-tile) init: normalize q once, fold 1/temp into it ----
    @pl.when(j == 0)
    def _init():
        q = s_ref[...].astype(jnp.float32)
        # F.normalize(q, dim=1, eps=1e-12)  ==  q * rsqrt(max(sum(q^2), 1e-24))
        inv_q = lax.rsqrt(jnp.maximum(jnp.sum(q * q, axis=1, keepdims=True), 1e-24))
        qn_sc[...] = (q * (inv_q * inv_temp)).astype(qn_sc.dtype)   # bf16, /temp folded
        m_sc[...] = jnp.full(m_sc.shape, -jnp.inf, dtype=m_sc.dtype)
        l_sc[...] = jnp.zeros(l_sc.shape, dtype=l_sc.dtype)
        d_sc[...] = jnp.zeros(d_sc.shape, dtype=d_sc.dtype)

    # ---- normalize the key tile (f32 VPU math, rsqrt on the EUP) -------------
    k = t_ref[...].astype(jnp.float32)
    inv_k = lax.rsqrt(jnp.maximum(jnp.sum(k * k, axis=1, keepdims=True), 1e-24))
    k_n = k * inv_k

    # ---- logits tile: 'nc,mc->nm' directly on the MXU (no transpose), --------
    #      bf16 operands, f32 accumulation; already divided by temp.
    s = lax.dot_general(qn_sc[...], k_n.astype(jnp.bfloat16),
                        (((1,), (1,)), ((), ())),
                        preferred_element_type=jnp.float32)          # (Tq, Tk)

    # ---- online logsumexp accumulation over key tiles -------------------------
    m_prev = m_sc[...]
    m_new = jnp.maximum(m_prev, jnp.max(s, axis=1, keepdims=True))
    l_sc[...] = (jnp.exp(m_prev - m_new) * l_sc[...]
                 + jnp.sum(jnp.exp(s - m_new), axis=1, keepdims=True))
    m_sc[...] = m_new

    # ---- diagonal logits (labels == arange): row-wise dot, only when j == i --
    @pl.when(j == i)
    def _diag():
        d_sc[...] = jnp.sum(qn_sc[...].astype(jnp.float32) * k_n,
                            axis=1, keepdims=True)

    # ---- finalize: per-row CE = lse - diag; emit lane-dense tile partial -----
    @pl.when(j == pl.num_programs(2) - 1)
    def _fin():
        per_row = m_sc[...] + jnp.log(l_sc[...]) - d_sc[...]         # (Tq, 1)
        out_ref[...] = jnp.broadcast_to(jnp.sum(per_row), out_ref.shape)


def simclr_forward(student_output, teacher_output, epoch=0, temp=0.2, tile_b=None):
    """Single-device SimCLR forward (world_size == 1, rank == 0)."""
    del epoch  # unused in the reference forward
    n2, c = student_output.shape
    assert n2 % 2 == 0, "batch axis must be chunkable into 2"
    b = n2 // 2

    # Row/key tile size. Prefer multiples of 128 (MXU-friendly); 8-aligned min.
    if tile_b is None:
        tile_b = next((t for t in (256, 128, 64, 32, 16, 8) if b % t == 0), b)
    assert b % tile_b == 0, "tile_b must divide B"
    nt = b // tile_b                    # number of row tiles == number of key tiles

    # VMEM budget: double-buffered q/k tiles + bf16 q scratch + logits tile.
    est = (4 * tile_b * c * 4           # 2 inputs x 2 pipeline buffers (f32)
           + 3 * tile_b * c * 4         # bf16 q scratch + f32 k_n + casts
           + 4 * tile_b * tile_b * 4    # logits tile + exp temporaries
           + (1 << 20))
    try:
        vmem_cap = pltpu.get_tpu_info().vmem_capacity_bytes
    except Exception:                   # conservative fallback (v7x-sized)
        vmem_cap = 64 * 1024 * 1024
    vmem_limit = int(min(max(4 * est, 32 * 1024 * 1024), 0.75 * vmem_cap))

    inv_temp = 1.0 / float(temp)
    grid = (2, nt, nt)                  # (pair, query row tile, key tile)

    itemsize = jnp.dtype(student_output.dtype).itemsize
    cost = pl.CostEstimate(
        flops=4 * b * b * c,                              # two (B,B,C) matmuls
        transcendentals=2 * b * b + 8 * b,                # exp over logits + rsqrt
        bytes_accessed=(n2 * c + 2 * nt * b * c) * itemsize + 2 * nt * 128 * 4)

    kernel = functools.partial(simclr_kernel, inv_temp=inv_temp)

    partials = pl.pallas_call(
        kernel,
        out_shape=jax.ShapeDtypeStruct((2, nt, 1, 128), jnp.float32),
        grid_spec=pltpu.PrefetchScalarGridSpec(
            num_scalar_prefetch=0,
            grid=grid,
            in_specs=[
                # student: pair p reads half p, row tile i.
                pl.BlockSpec((tile_b, c), lambda p, i, j: (p * nt + i, 0)),
                # teacher: pair p reads half (1 - p), key tile j.
                pl.BlockSpec((tile_b, c), lambda p, i, j: ((1 - p) * nt + j, 0)),
            ],
            out_specs=pl.BlockSpec((1, 1, 1, 128), lambda p, i, j: (p, i, 0, 0)),
            scratch_shapes=[
                pltpu.VMEM((tile_b, c), jnp.bfloat16),    # normalized, temp-scaled q
                pltpu.VMEM((tile_b, 1), jnp.float32),     # running row max
                pltpu.VMEM((tile_b, 1), jnp.float32),     # running row sum-exp
                pltpu.VMEM((tile_b, 1), jnp.float32),     # diagonal logits
            ],
        ),
        compiler_params=pltpu.CompilerParams(
            dimension_semantics=("parallel", "parallel", "arbitrary"),
            vmem_limit_bytes=vmem_limit),
        cost_estimate=cost,
    )(student_output, teacher_output)

    # mean over rows per pair, sum of the two pairs, times 2 * temp.
    return jnp.sum(partials[:, :, 0, 0]) * (2.0 * temp / b)


def _simclr_ref(student_output, teacher_output, temp=0.2):
    """Pure-JAX reference (mirrors the PyTorch code, single device)."""
    def cl(q, k):
        q = q / jnp.maximum(jnp.linalg.norm(q, axis=1, keepdims=True), 1e-12)
        k = k / jnp.maximum(jnp.linalg.norm(k, axis=1, keepdims=True), 1e-12)
        logits = (q @ k.T) / temp
        n = logits.shape[0]
        lse = jax.scipy.special.logsumexp(logits, axis=1)
        ce = jnp.mean(lse - logits[jnp.arange(n), jnp.arange(n)])
        return ce * (2.0 * temp)

    s1, s2 = jnp.split(student_output, 2, axis=0)
    t1, t2 = jnp.split(teacher_output, 2, axis=0)
    return cl(s1, t2) + cl(s2, t1)


if __name__ == "__main__":
    key = jax.random.PRNGKey(0)
    k1, k2 = jax.random.split(key)

    B, C = 128, 128                    # 2*B = 256 embeddings of dim 128 (lane-dense)
    student = jax.random.normal(k1, (2 * B, C), dtype=jnp.float32)
    teacher = jax.random.normal(k2, (2 * B, C), dtype=jnp.float32)

    # tile_b=32 exercises the multi-row-tile / multi-key-tile online-LSE path.
    loss = simclr_forward(student, teacher, epoch=0, temp=0.2, tile_b=32)
    loss = jax.block_until_ready(loss)

    ref = _simclr_ref(student, teacher, temp=0.2)
    # bf16 operands at the MXU -> loosened tolerance vs. the f32 reference.
    assert jnp.allclose(loss, ref, atol=1e-2, rtol=1e-2), (loss, ref)

    print("KERNEL_OK")
</pallas_src>

<mosaic_0001>
module attributes {stable_mosaic.version = 11 : i64} {
  func.func @simclr_kernel(%arg0: i32, %arg1: i32, %arg2: i32, %arg3: memref<32x128xf32, #tpu.memory_space<vmem>>, %arg4: memref<32x128xf32, #tpu.memory_space<vmem>>, %arg5: memref<1x1x1x128xf32, #tpu.memory_space<vmem>>, %arg6: memref<32x128xbf16, #tpu.memory_space<vmem>>, %arg7: memref<32x1xf32, #tpu.memory_space<vmem>>, %arg8: memref<32x1xf32, #tpu.memory_space<vmem>>, %arg9: memref<32x1xf32, #tpu.memory_space<vmem>>) attributes {dimension_semantics = [#tpu.dimension_semantics<parallel>, #tpu.dimension_semantics<parallel>, #tpu.dimension_semantics<arbitrary>], iteration_bounds = array<i64: 2, 4, 4>, scalar_prefetch = 0 : i64, scratch_operands = 4 : i64, tpu.core_type = #tpu.core_type<tc>, window_params = [{transform_indices = @transform_0, window_bounds = array<i64: 32, 128>}, {transform_indices = @transform_1, window_bounds = array<i64: 32, 128>}, {transform_indices = @transform_2, window_bounds = array<i64: 1, 1, 1, 128>}]} {
    %c0_i32 = arith.constant 0 : i32
    %0 = arith.cmpi eq, %arg2, %c0_i32 : i32
    %1 = arith.extui %0 : i1 to i32
    %c0_i32_0 = arith.constant 0 : i32
    %2 = arith.cmpi ne, %1, %c0_i32_0 : i32
    scf.if %2 {
      %c0_18 = arith.constant 0 : index
      %c0_19 = arith.constant 0 : index
      %37 = vector.load %arg3[%c0_18, %c0_19] : memref<32x128xf32, #tpu.memory_space<vmem>>, vector<32x128xf32>
      %38 = arith.mulf %37, %37 : vector<32x128xf32>
      %cst_20 = arith.constant dense<0.000000e+00> : vector<32xf32>
      %39 = vector.multi_reduction <add>, %38, %cst_20 [1] : vector<32x128xf32> to vector<32xf32>
      %40 = vector.shape_cast %39 : vector<32xf32> to vector<32x1xf32>
      %cst_21 = arith.constant 1.000000e-24 : f32
      %41 = vector.broadcast %cst_21 : f32 to vector<32x1xf32>
      %42 = arith.maximumf %40, %41 : vector<32x1xf32>
      %43 = math.rsqrt %42 : vector<32x1xf32>
      %cst_22 = arith.constant 5.000000e+00 : f32
      %44 = vector.broadcast %cst_22 : f32 to vector<32x1xf32>
      %45 = arith.mulf %43, %44 : vector<32x1xf32>
      %46 = vector.broadcast %45 : vector<32x1xf32> to vector<32x128xf32>
      %47 = arith.mulf %37, %46 : vector<32x128xf32>
      %48 = arith.truncf %47 : vector<32x128xf32> to vector<32x128xbf16>
      %c0_23 = arith.constant 0 : index
      %c0_24 = arith.constant 0 : index
      %49 = vector.load %arg6[%c0_23, %c0_24] : memref<32x128xbf16, #tpu.memory_space<vmem>>, vector<32x128xbf16>
      tpu.vector_store %arg6[%c0_23, %c0_24], %48 {strides = array<i32>} : memref<32x128xbf16, #tpu.memory_space<vmem>>, vector<32x128xbf16>,
      %cst_25 = arith.constant 0xFF800000 : f32
      %50 = vector.broadcast %cst_25 : f32 to vector<32x1xf32>
      %c0_26 = arith.constant 0 : index
      %c0_27 = arith.constant 0 : index
      %51 = vector.load %arg7[%c0_26, %c0_27] : memref<32x1xf32, #tpu.memory_space<vmem>>, vector<32x1xf32>
      tpu.vector_store %arg7[%c0_26, %c0_27], %50 {strides = array<i32>} : memref<32x1xf32, #tpu.memory_space<vmem>>, vector<32x1xf32>,
      %cst_28 = arith.constant 0.000000e+00 : f32
      %52 = vector.broadcast %cst_28 : f32 to vector<32x1xf32>
      %c0_29 = arith.constant 0 : index
      %c0_30 = arith.constant 0 : index
      %53 = vector.load %arg8[%c0_29, %c0_30] : memref<32x1xf32, #tpu.memory_space<vmem>>, vector<32x1xf32>
      tpu.vector_store %arg8[%c0_29, %c0_30], %52 {strides = array<i32>} : memref<32x1xf32, #tpu.memory_space<vmem>>, vector<32x1xf32>,
      %cst_31 = arith.constant 0.000000e+00 : f32
      %54 = vector.broadcast %cst_31 : f32 to vector<32x1xf32>
      %c0_32 = arith.constant 0 : index
      %c0_33 = arith.constant 0 : index
      %55 = vector.load %arg9[%c0_32, %c0_33] : memref<32x1xf32, #tpu.memory_space<vmem>>, vector<32x1xf32>
      tpu.vector_store %arg9[%c0_32, %c0_33], %54 {strides = array<i32>} : memref<32x1xf32, #tpu.memory_space<vmem>>, vector<32x1xf32>,
    } else {
    }
    %c0 = arith.constant 0 : index
    %c0_1 = arith.constant 0 : index
    %3 = vector.load %arg4[%c0, %c0_1] : memref<32x128xf32, #tpu.memory_space<vmem>>, vector<32x128xf32>
    %4 = arith.mulf %3, %3 : vector<32x128xf32>
    %cst = arith.constant dense<0.000000e+00> : vector<32xf32>
    %5 = vector.multi_reduction <add>, %4, %cst [1] : vector<32x128xf32> to vector<32xf32>
    %6 = vector.shape_cast %5 : vector<32xf32> to vector<32x1xf32>
    %cst_2 = arith.constant 1.000000e-24 : f32
    %7 = vector.broadcast %cst_2 : f32 to vector<32x1xf32>
    %8 = arith.maximumf %6, %7 : vector<32x1xf32>
    %9 = math.rsqrt %8 : vector<32x1xf32>
    %10 = vector.broadcast %9 : vector<32x1xf32> to vector<32x128xf32>
    %11 = arith.mulf %3, %10 : vector<32x128xf32>
    %c0_3 = arith.constant 0 : index
    %c0_4 = arith.constant 0 : index
    %12 = vector.load %arg6[%c0_3, %c0_4] : memref<32x128xbf16, #tpu.memory_space<vmem>>, vector<32x128xbf16>
    %13 = arith.truncf %11 : vector<32x128xf32> to vector<32x128xbf16>
    %cst_5 = arith.constant dense<0.000000e+00> : vector<32x32xf32>
    %14 = tpu.matmul %12, %13, %cst_5 {dimension_numbers = #tpu.dot_dimension_numbers<[1], [1], [0], [0], [0, 0, 1, 0], [], []>} : vector<32x128xbf16>, vector<32x128xbf16>, vector<32x32xf32> -> vector<32x32xf32>
    %c0_6 = arith.constant 0 : index
    %c0_7 = arith.constant 0 : index
    %15 = vector.load %arg7[%c0_6, %c0_7] : memref<32x1xf32, #tpu.memory_space<vmem>>, vector<32x1xf32>
    %cst_8 = arith.constant dense<0xFF800000> : vector<32xf32>
    %16 = vector.multi_reduction <maximumf>, %14, %cst_8 [1] : vector<32x32xf32> to vector<32xf32>
    %17 = vector.shape_cast %16 : vector<32xf32> to vector<32x1xf32>
    %18 = arith.maximumf %15, %17 : vector<32x1xf32>
    %19 = arith.subf %15, %18 : vector<32x1xf32>
    %20 = math.exp %19 : vector<32x1xf32>
    %c0_9 = arith.constant 0 : index
    %c0_10 = arith.constant 0 : index
    %21 = vector.load %arg8[%c0_9, %c0_10] : memref<32x1xf32, #tpu.memory_space<vmem>>, vector<32x1xf32>
    %22 = arith.mulf %20, %21 : vector<32x1xf32>
    %23 = vector.broadcast %18 : vector<32x1xf32> to vector<32x32xf32>
    %24 = arith.subf %14, %23 : vector<32x32xf32>
    %25 = math.exp %24 : vector<32x32xf32>
    %cst_11 = arith.constant dense<0.000000e+00> : vector<32xf32>
    %26 = vector.multi_reduction <add>, %25, %cst_11 [1] : vector<32x32xf32> to vector<32xf32>
    %27 = vector.shape_cast %26 : vector<32xf32> to vector<32x1xf32>
    %28 = arith.addf %22, %27 : vector<32x1xf32>
    %c0_12 = arith.constant 0 : index
    %c0_13 = arith.constant 0 : index
    %29 = vector.load %arg8[%c0_12, %c0_13] : memref<32x1xf32, #tpu.memory_space<vmem>>, vector<32x1xf32>
    tpu.vector_store %arg8[%c0_12, %c0_13], %28 {strides = array<i32>} : memref<32x1xf32, #tpu.memory_space<vmem>>, vector<32x1xf32>,
    %c0_14 = arith.constant 0 : index
    %c0_15 = arith.constant 0 : index
    %30 = vector.load %arg7[%c0_14, %c0_15] : memref<32x1xf32, #tpu.memory_space<vmem>>, vector<32x1xf32>
    tpu.vector_store %arg7[%c0_14, %c0_15], %18 {strides = array<i32>} : memref<32x1xf32, #tpu.memory_space<vmem>>, vector<32x1xf32>,
    %31 = arith.cmpi eq, %arg2, %arg1 : i32
    %32 = arith.extui %31 : i1 to i32
    %c0_i32_16 = arith.constant 0 : i32
    %33 = arith.cmpi ne, %32, %c0_i32_16 : i32
    scf.if %33 {
      %c0_18 = arith.constant 0 : index
      %c0_19 = arith.constant 0 : index
      %37 = vector.load %arg6[%c0_18, %c0_19] : memref<32x128xbf16, #tpu.memory_space<vmem>>, vector<32x128xbf16>
      %38 = arith.extf %37 : vector<32x128xbf16> to vector<32x128xf32>
      %39 = arith.mulf %38, %11 : vector<32x128xf32>
      %cst_20 = arith.constant dense<0.000000e+00> : vector<32xf32>
      %40 = vector.multi_reduction <add>, %39, %cst_20 [1] : vector<32x128xf32> to vector<32xf32>
      %41 = vector.shape_cast %40 : vector<32xf32> to vector<32x1xf32>
      %c0_21 = arith.constant 0 : index
      %c0_22 = arith.constant 0 : index
      %42 = vector.load %arg9[%c0_21, %c0_22] : memref<32x1xf32, #tpu.memory_space<vmem>>, vector<32x1xf32>
      tpu.vector_store %arg9[%c0_21, %c0_22], %41 {strides = array<i32>} : memref<32x1xf32, #tpu.memory_space<vmem>>, vector<32x1xf32>,
    } else {
    }
    %c3_i32 = arith.constant 3 : i32
    %34 = arith.cmpi eq, %arg2, %c3_i32 : i32
    %35 = arith.extui %34 : i1 to i32
    %c0_i32_17 = arith.constant 0 : i32
    %36 = arith.cmpi ne, %35, %c0_i32_17 : i32
    scf.if %36 {
      %c0_18 = arith.constant 0 : index
      %c0_19 = arith.constant 0 : index
      %37 = vector.load %arg7[%c0_18, %c0_19] : memref<32x1xf32, #tpu.memory_space<vmem>>, vector<32x1xf32>
      %c0_20 = arith.constant 0 : index
      %c0_21 = arith.constant 0 : index
      %38 = vector.load %arg8[%c0_20, %c0_21] : memref<32x1xf32, #tpu.memory_space<vmem>>, vector<32x1xf32>
      %39 = math.log %38 : vector<32x1xf32>
      %40 = arith.addf %37, %39 : vector<32x1xf32>
      %c0_22 = arith.constant 0 : index
      %c0_23 = arith.constant 0 : index
      %41 = vector.load %arg9[%c0_22, %c0_23] : memref<32x1xf32, #tpu.memory_space<vmem>>, vector<32x1xf32>
      %42 = arith.subf %40, %41 : vector<32x1xf32>
      %43 = vector.shape_cast %42 : vector<32x1xf32> to vector<1x32x1xf32>
      %cst_24 = arith.constant dense<0.000000e+00> : vector<1xf32>
      %44 = vector.multi_reduction <add>, %43, %cst_24 [1, 2] : vector<1x32x1xf32> to vector<1xf32>
      %45 = vector.shape_cast %44 : vector<1xf32> to vector<1x1x1xf32>
      %46 = vector.extract %45[0, 0, 0] : f32 from vector<1x1x1xf32>
      %47 = vector.broadcast %46 : f32 to vector<1x1x1x128xf32>
      %c0_25 = arith.constant 0 : index
      %c0_26 = arith.constant 0 : index
      %c0_27 = arith.constant 0 : index
      %c0_28 = arith.constant 0 : index
      %48 = vector.load %arg5[%c0_25, %c0_26, %c0_27, %c0_28] : memref<1x1x1x128xf32, #tpu.memory_space<vmem>>, vector<1x1x1x128xf32>
      tpu.vector_store %arg5[%c0_25, %c0_26, %c0_27, %c0_28], %47 {strides = array<i32>} : memref<1x1x1x128xf32, #tpu.memory_space<vmem>>, vector<1x1x1x128xf32>,
    } else {
    }
    return
  }
  func.func @transform_0(%arg0: i32, %arg1: i32, %arg2: i32) -> (i32, i32) {
    %c4_i32 = arith.constant 4 : i32
    %0 = arith.muli %arg0, %c4_i32 : i32
    %1 = arith.addi %0, %arg1 : i32
    %c0_i32 = arith.constant 0 : i32
    %c0_i32_0 = arith.constant 0 : i32
    return %1, %c0_i32 : i32, i32
  }
  func.func @transform_1(%arg0: i32, %arg1: i32, %arg2: i32) -> (i32, i32) {
    %c1_i32 = arith.constant 1 : i32
    %0 = arith.subi %c1_i32, %arg0 : i32
    %c4_i32 = arith.constant 4 : i32
    %1 = arith.muli %0, %c4_i32 : i32
    %2 = arith.addi %1, %arg2 : i32
    %c0_i32 = arith.constant 0 : i32
    %c0_i32_0 = arith.constant 0 : i32
    return %2, %c0_i32 : i32, i32
  }
  func.func @transform_2(%arg0: i32, %arg1: i32, %arg2: i32) -> (i32, i32, i32, i32) {
    %c0_i32 = arith.constant 0 : i32
    %c0_i32_0 = arith.constant 0 : i32
    %c0_i32_1 = arith.constant 0 : i32
    return %arg0, %arg1, %c0_i32, %c0_i32_0 : i32, i32, i32, i32
  }
}

</mosaic_0001>

<llo_original>
// kernel: tpu_custom_call.1
$region0: #{tpu_custom_call.1}
  #allocation0 [shape = 'u32[]', space=smem, size = 0x4, offset = 0x4, fixed_abs, tag = 'smem constant byte address 0x4 - core index']
  #allocation1 [shape = 'u32[144,128]{1,0:T(1,128)}', space=vmem, size = 0x12000, scoped, tag = 'internal scratch']
  #allocation2 [shape = 'bf16[32,128]{1,0:T(16,128)(2,1)}', space=vmem, size = 0x2000, scoped, tag = 'scratch operand']
  #allocation3 [shape = 'f32[32,1]{1,0:T(8,128)}', space=vmem, size = 0x4000, scoped, tag = 'scratch operand']
  #allocation4 [shape = 'f32[32,1]{1,0:T(8,128)}', space=vmem, size = 0x4000, scoped, tag = 'scratch operand']
  #allocation5 [shape = 'f32[32,1]{1,0:T(8,128)}', space=vmem, size = 0x4000, scoped, tag = 'scratch operand']
  %s0 = inlined_call_operand.hbm [shape: f32[256,128], index: 0, kind: input, shape index: {}]
  %s1 = inlined_call_operand.hbm [shape: f32[256,128], index: 1, kind: input, shape index: {}]
  %s2 = inlined_call_operand.hbm [shape: f32[2,4,1,128], index: 2, kind: output, shape index: {}]
  %s3 = sld [smem:[#allocation0]]
  $region61: #{tpu_custom_call.1} parent=0
    _
  %s5 = ssub.s32 1, %s3
  %s6 = scalar_select 0, %s5, %s3
  $region1: #{tpu_custom_call.1} parent=0
    #allocation6 [shape = 'u8[32768]{0}', space=vmem, size = 0x8000, scoped, tag = 'input window, operand 0']
    #allocation7 [shape = 's32[2]{0}', space=sflag, size = 0x8, scoped, tag = 'scoped memory for tpu_custom_call.1']
    #allocation8 [shape = 's32[2]{0}', space=sflag, size = 0x8, scoped, tag = 'scoped memory for tpu_custom_call.1']
    #allocation9 [shape = 'u8[32768]{0}', space=vmem, size = 0x8000, scoped, tag = 'input window, operand 1']
    #allocation10 [shape = 's32[2]{0}', space=sflag, size = 0x8, scoped, tag = 'scoped memory for tpu_custom_call.1']
    #allocation11 [shape = 'u8[1024]{0}', space=vmem, size = 0x400, scoped, tag = 'output window, operand 0']
    %7 = vsyncpa [#allocation7], 0
    %s8 = scalar_lea.sflag [#allocation7], 1
    %9 = vsyncpa %s8, 0
    %10 = vsyncpa [#allocation10], 0
    %s11 = scalar_lea.sflag [#allocation10], 1
    %12 = vsyncpa %s11, 0
    %13 = vsyncpa [#allocation8], 0
    %s14 = scalar_lea.sflag [#allocation8], 1
    %15 = vsyncpa %s14, 0
    loop: start=0, step=1, limit=34
    $region2: #{tpu_custom_call.1} parent=1 // loop_pre_header
      _
    $region3: #{tpu_custom_call.1} parent=1 // loop_header
      %s17 = sphi 0, %s21
      %p18 = scmp.ge.s32.totalorder %s17, 34
      %s24 = sphi 0, %s43
      %s25 = sphi 0, %s39
      %s26 = sphi 0, %s35
      %s27 = sphi 0, %s24
      %s28 = sphi 0, %s25
      %s29 = sphi 0, %s26
      %s30 = sphi 0, %s27
      %s31 = sphi 0, %s28
      %s32 = sphi 0, %s29
      %s50 = sphi 0, %s52
      %s53 = sphi 0, %s50
      %s54 = sphi 0, %s53
      %s70 = sphi 0, %s54
      %s82 = sphi 0, %s84
      %s85 = sphi 0, %s82
      %s86 = sphi 0, %s85
      %s102 = sphi 0, %s86
      %s110 = sphi 0, %s112
      %s113 = sphi 0, %s110
      %s114 = sphi 0, %s113
      %s130 = sphi 0, %s114
    $region4: #{tpu_custom_call.1} parent=1 // loop_header_branch
      %20 = sbr.rel (%p18) target = $region8
    $region5: #{tpu_custom_call.1} parent=1 // loop_body
      %s22 = ssub.s32 %s17, 1
      %s23 = ssub.s32 %s17, 2
      %s33 = sadd.s32 1, %s26
      %p34 = scmp.ge.s32.totalorder %s33, 4
      %s35 = scalar_select %p34, 0, %s33
      %s36 = sadd.s32 1, %s25
      %s37 = scalar_select %p34, %s36, %s25
      %p38 = scmp.ge.s32.totalorder %s37, 4
      %s39 = scalar_select %p38, 0, %s37
      %s40 = sadd.s32 1, %s24
      %s41 = scalar_select %p38, %s40, %s24
      %p42 = scmp.ge.s32.totalorder %s41, 2
      %s43 = scalar_select %p42, 0, %s41
      %s44 = smul.u32 %s24, 4
      %s45 = sadd.s32 %s44, %s25
      %s46 = smul.u32 %s43, 4
      %s47 = sadd.s32 %s46, %s39
      %s48 = ssub.s32 %s45, %s47
      %p49 = scmp.eq.s32.totalorder %s48, 0
      %s51 = sadd.s32 %s50, 1
      %s52 = scalar_select %p49, %s50, %s51
      %p55 = pneg %p49
      %p56 = scmp.eq.s32.totalorder %s17, 31
      %p57 = por %p55, %p56
      %p58 = scmp.ne.s32.totalorder %s50, %s53
      %p59 = scmp.eq.s32.totalorder %s17, 0
      %p60 = por %p58, %p59
      %p61 = scmp.ne.s32.totalorder %s50, %s53
      %p62 = scmp.eq.s32.totalorder %s22, 31
      %p63 = por %p61, %p62
      %p64 = scmp.ne.s32.totalorder %s53, %s54
      %p65 = scmp.eq.s32.totalorder %s22, 0
      %p66 = por %p64, %p65
      %p67 = scmp.ne.s32.totalorder %s53, %s54
      %p68 = scmp.eq.s32.totalorder %s23, 31
      %p69 = por %p67, %p68
      %p71 = scmp.ne.s32.totalorder %s54, %s70
      %p72 = scmp.eq.s32.totalorder %s23, 0
      %p73 = por %p71, %p72
      %s74 = ssub.s32 1, %s24
      %s75 = smul.u32 %s74, 4
      %s76 = sadd.s32 %s75, %s26
      %s77 = ssub.s32 1, %s43
      %s78 = smul.u32 %s77, 4
      %s79 = sadd.s32 %s78, %s35
      %s80 = ssub.s32 %s76, %s79
      %p81 = scmp.eq.s32.totalorder %s80, 0
      %s83 = sadd.s32 %s82, 1
      %s84 = scalar_select %p81, %s82, %s83
      %p87 = pneg %p81
      %p88 = scmp.eq.s32.totalorder %s17, 31
      %p89 = por %p87, %p88
      %p90 = scmp.ne.s32.totalorder %s82, %s85
      %p91 = scmp.eq.s32.totalorder %s17, 0
      %p92 = por %p90, %p91
      %p93 = scmp.ne.s32.totalorder %s82, %s85
      %p94 = scmp.eq.s32.totalorder %s22, 31
      %p95 = por %p93, %p94
      %p96 = scmp.ne.s32.totalorder %s85, %s86
      %p97 = scmp.eq.s32.totalorder %s22, 0
      %p98 = por %p96, %p97
      %p99 = scmp.ne.s32.totalorder %s85, %s86
      %p100 = scmp.eq.s32.totalorder %s23, 31
      %p101 = por %p99, %p100
      %p103 = scmp.ne.s32.totalorder %s86, %s102
      %p104 = scmp.eq.s32.totalorder %s23, 0
      %p105 = por %p103, %p104
      %s106 = ssub.s32 %s24, %s43
      %s107 = ssub.s32 %s25, %s39
      %s108 = sor.u32 %s106, %s107
      %p109 = scmp.eq.s32.totalorder %s108, 0
      %s111 = sadd.s32 %s110, 1
      %s112 = scalar_select %p109, %s110, %s111
      %p115 = pneg %p109
      %p116 = scmp.eq.s32.totalorder %s17, 31
      %p117 = por %p115, %p116
      %p118 = scmp.ne.s32.totalorder %s110, %s113
      %p119 = scmp.eq.s32.totalorder %s17, 0
      %p120 = por %p118, %p119
      %p121 = scmp.ne.s32.totalorder %s110, %s113
      %p122 = scmp.eq.s32.totalorder %s22, 31
      %p123 = por %p121, %p122
      %p124 = scmp.ne.s32.totalorder %s113, %s114
      %p125 = scmp.eq.s32.totalorder %s22, 0
      %p126 = por %p124, %p125
      %p127 = scmp.ne.s32.totalorder %s113, %s114
      %p128 = scmp.eq.s32.totalorder %s23, 31
      %p129 = por %p127, %p128
      %p131 = scmp.ne.s32.totalorder %s114, %s130
      %p132 = scmp.eq.s32.totalorder %s23, 0
      %p133 = por %p131, %p132
      %p134 = scmp.le.s32.totalorder 1, %s17
      %p135 = scmp.lt.s32.totalorder %s17, 33
      %p136 = pnand %p134, %p135
      %p137 = pneg %p136
      // Predicated region
      $region9: #{tpu_custom_call.1} parent=5 // pred_check
        _
      $region10: #{tpu_custom_call.1} parent=5 // pred_check_branch
        %139 = sbr.rel (%p136) target = $region12
      $region11: #{tpu_custom_call.1} parent=5 // pred_region
        %s140 = ssub.s32 %s17, 1
      $region12: #{tpu_custom_call.1} parent=5 // pred_fallthru
        _
      %p141 = scmp.lt.s32.totalorder %s17, 32
      // Predicated region
      $region13: #{tpu_custom_call.1} parent=5 // pred_check
        %p142 = pneg %p141
      $region14: #{tpu_custom_call.1} parent=5 // pred_check_branch
        %144 = sbr.rel (%p142) target = $region16
      $region15: #{tpu_custom_call.1} parent=5 // pred_region
        // Predicated region
        $region17: #{tpu_custom_call.1} parent=15 // pred_check
          %p145 = pneg %p60
        $region18: #{tpu_custom_call.1} parent=15 // pred_check_branch
          %147 = sbr.rel (%p145) target = $region20
        $region19: #{tpu_custom_call.1} parent=15 // pred_region
          %s148 = sand.u32 %s50, 1
          %s149 = scalar_lea.sflag [#allocation7], %s148
          %s150 = sand.u32 %s50, 1
          %s151 = smul.addr %s150, 32
          %s152 = scalar_lea.vmem [#allocation6], %s151
          %s153 = smul.u32 %s24, 4
          %s154 = sadd.s32 %s153, %s25
          %s155 = smul.u32 4, %s154
          %s157 = ssub.s32 512, 512
          %158 = vsyncadd %s149, %s157
          %s159 = smul.addr %s155, 128
          %s160 = scalar_lea.hbm %s0, %s159
          %s161 = sshll.u32 %s152, 4
          %s162 = int_to_ptr.vmem [resolvable:$true] %s161
          %167 = dma.hbm_to_vmem [thread:$0]  %s160, 512, %s162, %s149, 128, 128, 8
        $region20: #{tpu_custom_call.1} parent=15 // pred_fallthru
          _
        // Predicated region
        $region21: #{tpu_custom_call.1} parent=15 // pred_check
          %p168 = pneg %p92
        $region22: #{tpu_custom_call.1} parent=15 // pred_check_branch
          %170 = sbr.rel (%p168) target = $region24
        $region23: #{tpu_custom_call.1} parent=15 // pred_region
          %s171 = sand.u32 %s82, 1
          %s172 = scalar_lea.sflag [#allocation10], %s171
          %s173 = sand.u32 %s82, 1
          %s174 = smul.addr %s173, 32
          %s175 = scalar_lea.vmem [#allocation9], %s174
          %s176 = ssub.s32 1, %s24
          %s177 = smul.u32 %s176, 4
          %s178 = sadd.s32 %s177, %s26
          %s179 = smul.u32 4, %s178
          %s181 = ssub.s32 512, 512
          %182 = vsyncadd %s172, %s181
          %s183 = smul.addr %s179, 128
          %s184 = scalar_lea.hbm %s1, %s183
          %s185 = sshll.u32 %s175, 4
          %s186 = int_to_ptr.vmem [resolvable:$true] %s185
          %191 = dma.hbm_to_vmem [thread:$0]  %s184, 512, %s186, %s172, 128, 128, 8
        $region24: #{tpu_custom_call.1} parent=15 // pred_fallthru
          _
      $region16: #{tpu_custom_call.1} parent=5 // pred_fallthru
        _
      %p192 = scmp.le.s32.totalorder 1, %s17
      %p193 = scmp.lt.s32.totalorder %s17, 33
      %p194 = pnand %p192, %p193
      %p195 = pneg %p194
      // Predicated region
      $region25: #{tpu_custom_call.1} parent=5 // pred_check
        _
      $region26: #{tpu_custom_call.1} parent=5 // pred_check_branch
        %197 = sbr.rel (%p194) target = $region28
      $region27: #{tpu_custom_call.1} parent=5 // pred_region
        %s198 = ssub.s32 %s17, 1
        %s199 = sand.u32 %s53, 1
        %s200 = scalar_lea.sflag [#allocation7], %s199
        %s201 = sand.u32 %s53, 1
        %s202 = smul.addr %s201, 32
        %s203 = scalar_lea.vmem [#allocation6], %s202
        // Predicated region
        $region29: #{tpu_custom_call.1} parent=27 // pred_check
          %p204 = pneg %p66
        $region30: #{tpu_custom_call.1} parent=27 // pred_check_branch
          %206 = sbr.rel (%p204) target = $region32
        $region31: #{tpu_custom_call.1} parent=27 // pred_region
          %207 = dma.done %s200, 512
        $region32: #{tpu_custom_call.1} parent=27 // pred_fallthru
          _
        %s208 = sand.u32 %s85, 1
        %s209 = scalar_lea.sflag [#allocation10], %s208
        %s210 = sand.u32 %s85, 1
        %s211 = smul.addr %s210, 32
        %s212 = scalar_lea.vmem [#allocation9], %s211
        // Predicated region
        $region33: #{tpu_custom_call.1} parent=27 // pred_check
          %p213 = pneg %p98
        $region34: #{tpu_custom_call.1} parent=27 // pred_check_branch
          %215 = sbr.rel (%p213) target = $region36
        $region35: #{tpu_custom_call.1} parent=27 // pred_region
          %216 = dma.done %s209, 512
        $region36: #{tpu_custom_call.1} parent=27 // pred_fallthru
          _
        %s217 = sand.u32 %s53, 1
        %s218 = scalar_lea.sflag [#allocation7], %s217
        %s219 = sand.u32 %s53, 1
        %s220 = smul.addr %s219, 32
        %s221 = scalar_lea.vmem [#allocation6], %s220
        %p222 = pneg %p66
        %p223 = pneg %p63
        %s224 = sand.u32 %s85, 1
        %s225 = scalar_lea.sflag [#allocation10], %s224
        %s226 = sand.u32 %s85, 1
        %s227 = smul.addr %s226, 32
        %s228 = scalar_lea.vmem [#allocation9], %s227
        %p229 = pneg %p98
        %p230 = pneg %p95
        %p231 = pneg %p126
        %p232 = pneg %p123
        %s233 = sand.u32 %s113, 1
        %s234 = scalar_lea.sflag [#allocation8], %s233
        %s235 = sand.u32 %s113, 1
        %s236 = scalar_lea.vmem [#allocation11], %s235
        %s237 = smul.u32 %s27, 4
        %s238 = sadd.s32 %s237, %s28
        %s239 = smul.u32 4, %s238
        %s240 = ssub.s32 1, %s27
        %s241 = smul.u32 %s240, 4
        %s242 = sadd.s32 %s241, %s29
        %s243 = smul.u32 4, %s242
        %p245 = scmp.eq.s32.totalorder %s29, 0
        // Predicated region
        $region37: #{tpu_custom_call.1} parent=27 // pred_check
          %p246 = pneg %p245
        $region38: #{tpu_custom_call.1} parent=27 // pred_check_branch
          %248 = sbr.rel (%p246) target = $region40
        $region39: #{tpu_custom_call.1} parent=27 // pred_region
          %v249 = vld [vmem:[%s203] sm:$0xff]
          %v250 = vld [vmem:[%s203 + $0x8] sm:$0xff]
          %v251 = vld [vmem:[%s203 + $0x10] sm:$0xff]
          %v252 = vld [vmem:[%s203 + $0x18] sm:$0xff]
          %v253 = vmul.f32 %v249, %v249
          %v254 = vmul.f32 %v250, %v250
          %v255 = vmul.f32 %v251, %v251
          %v256 = vmul.f32 %v252, %v252
          %257 = vadd.xlane.f32.xlu0 %v253
          %v258 = vpop.xlane.xlu0 %257
          %259 = vadd.xlane.f32.xlu0 %v254
          %v260 = vpop.xlane.xlu0 %259
          %261 = vadd.xlane.f32.xlu0 %v255
          %v262 = vpop.xlane.xlu0 %261
          %263 = vadd.xlane.f32.xlu0 %v256
          %v264 = vpop.xlane.xlu0 %263
          %v265 = vmax.f32 %v258, 1e-24
          %v266 = vmax.f32 %v260, 1e-24
          %v267 = vmax.f32 %v262, 1e-24
          %v268 = vmax.f32 %v264, 1e-24
          %v269 = vrsqrt.pop %v265
          %v270 = vrsqrt.pop %v266
          %v271 = vrsqrt.pop %v267
          %v272 = vrsqrt.pop %v268
          %v273 = vmul.f32 %v269, 5.0
          %v274 = vmul.f32 %v270, 5.0
          %v275 = vmul.f32 %v271, 5.0
          %v276 = vmul.f32 %v272, 5.0
          %v277 = vmul.f32 %v249, %v273
          %v278 = vmul.f32 %v250, %v274
          %v279 = vmul.f32 %v251, %v275
          %v280 = vmul.f32 %v252, %v276
          %v281 = vpack.c.bf16 %v278, %v277
          %v282 = vpack.c.bf16 %v280, %v279
          %283 = vst [vmem:[#allocation2] sm:$0xff] %v281
          %284 = vst [vmem:[#allocation2 + $0x8] sm:$0xff] %v282
          %vm285 = vcmask 7168
          %286 = vst.msk [vmem:[#allocation3] sm:$0xff] %vm285, -inf
          %287 = vst.msk [vmem:[#allocation3 + $0x8] sm:$0xff] %vm285, -inf
          %288 = vst.msk [vmem:[#allocation3 + $0x10] sm:$0xff] %vm285, -inf
          %289 = vst.msk [vmem:[#allocation3 + $0x18] sm:$0xff] %vm285, -inf
          %290 = vst.msk [vmem:[#allocation4] sm:$0xff] %vm285, 0.0
          %291 = vst.msk [vmem:[#allocation4 + $0x8] sm:$0xff] %vm285, 0.0
          %292 = vst.msk [vmem:[#allocation4 + $0x10] sm:$0xff] %vm285, 0.0
          %293 = vst.msk [vmem:[#allocation4 + $0x18] sm:$0xff] %vm285, 0.0
          %294 = vst.msk [vmem:[#allocation5] sm:$0xff] %vm285, 0.0
          %295 = vst.msk [vmem:[#allocation5 + $0x8] sm:$0xff] %vm285, 0.0
          %296 = vst.msk [vmem:[#allocation5 + $0x10] sm:$0xff] %vm285, 0.0
          %297 = vst.msk [vmem:[#allocation5 + $0x18] sm:$0xff] %vm285, 0.0
        $region40: #{tpu_custom_call.1} parent=27 // pred_fallthru
          _
        %v298 = vld [vmem:[%s212] sm:$0xff]
        %v299 = vld [vmem:[%s212 + $0x8] sm:$0xff]
        %v300 = vld [vmem:[%s212 + $0x10] sm:$0xff]
        %v301 = vld [vmem:[%s212 + $0x18] sm:$0xff]
        %v302 = vmul.f32 %v298, %v298
        %v303 = vmul.f32 %v299, %v299
        %v304 = vmul.f32 %v300, %v300
        %v305 = vmul.f32 %v301, %v301
        %306 = vadd.xlane.f32.xlu0 %v302
        %v307 = vpop.xlane.xlu0 %306
        %308 = vadd.xlane.f32.xlu0 %v303
        %v309 = vpop.xlane.xlu0 %308
        %310 = vadd.xlane.f32.xlu0 %v304
        %v311 = vpop.xlane.xlu0 %310
        %312 = vadd.xlane.f32.xlu0 %v305
        %v313 = vpop.xlane.xlu0 %312
        %v314 = vmax.f32 %v307, 1e-24
        %v315 = vmax.f32 %v309, 1e-24
        %v316 = vmax.f32 %v311, 1e-24
        %v317 = vmax.f32 %v313, 1e-24
        %v318 = vrsqrt.pop %v314
        %v319 = vrsqrt.pop %v315
        %v320 = vrsqrt.pop %v316
        %v321 = vrsqrt.pop %v317
        %v322 = vmul.f32 %v298, %v318
        %v323 = vmul.f32 %v299, %v319
        %v324 = vmul.f32 %v300, %v320
        %v325 = vmul.f32 %v301, %v321
        %v326 = vld [vmem:[#allocation2] sm:$0xff]
        %v327 = vld [vmem:[#allocation2 + $0x8] sm:$0xff]
        %v328 = vpack.c.bf16 %v323, %v322
        %v329 = vpack.c.bf16 %v325, %v324
        %330 = vmatprep.subr.bf16.mxu0 0
        %331 = vmatpush1.bf16.xpose.msra.mxu0 %v328
        %332 = vmatprep.subr.bf16.mxu0 0
        %333 = vmatpush1.bf16.xpose.msra.mxu0 %v329
        %334 = vmatprep.subr.bf16.mxu0 0
        %335 = vmatpush1.bf16.xpose.msra.mxu0 0
        %336 = vmatprep.subr.bf16.mxu0 0
        %337 = vmatpush1.bf16.xpose.msra.mxu0 0
        %338 = vmatprep.subr.bf16.mxu0 0
        %339 = vmatpush1.bf16.xpose.msra.mxu0 0
        %340 = vmatprep.subr.bf16.mxu0 0
        %341 = vmatpush1.bf16.xpose.msra.mxu0 0
        %342 = vmatprep.subr.bf16.mxu0 0
        %343 = vmatpush1.bf16.xpose.msra.mxu0 0
        %344 = vmatprep.subr.bf16.mxu0 0
        %345 = vmatpush1.bf16.xpose.msra.mxu0 0
        %346 = vmatprep.subr.bf16.mxu0 0
        %347 = vmatpush1.bf16.xpose.msra.mxu0 0
        %348 = vmatprep.subr.bf16.mxu0 0
        %349 = vmatpush1.bf16.xpose.msra.mxu0 0
        %350 = vmatprep.subr.bf16.mxu0 0
        %351 = vmatpush1.bf16.xpose.msra.mxu0 0
        %352 = vmatprep.subr.bf16.mxu0 0
        %353 = vmatpush1.bf16.xpose.msra.mxu0 0
        %354 = vmatprep.subr.bf16.mxu0 0
        %355 = vmatpush1.bf16.xpose.msra.mxu0 0
        %356 = vmatprep.subr.bf16.mxu0 0
        %357 = vmatpush1.bf16.xpose.msra.mxu0 0
        %358 = vmatprep.subr.bf16.mxu0 0
        %359 = vmatpush1.bf16.xpose.msra.mxu0 0
        %360 = vmatprep.subr.bf16.mxu0 0
        %361 = vmatpush1.bf16.xpose.msra.mxu0 0
        %362 = vmatprep.mubr.bf16.mxu0 0
        %363 = vmatmul.mubr.bf16.gmra.mrb[0].mxu0 %v326
        %v364 = vpop.f32.mrb[0].mxu0
        %v365 = vadd.f32 0.0, %v364
        %v366 = vpop.f32.mrb[0].mxu0
        %v367 = vpop.f32.mrb[0].mxu0
        %v368 = vadd.f32 0.0, %v367
        %v369 = vpop.f32.mrb[0].mxu0
        %370 = vmatprep.mubr.bf16.mxu0 0
        %371 = vmatmul.mubr.bf16.gmra.mrb[0].mxu0 %v327
        %v372 = vpop.f32.mrb[0].mxu0
        %v373 = vadd.f32 0.0, %v372
        %v374 = vpop.f32.mrb[0].mxu0
        %v375 = vpop.f32.mrb[0].mxu0
        %v376 = vadd.f32 0.0, %v375
        %v377 = vpop.f32.mrb[0].mxu0
        %378 = vdwg.mxu0
        %v379 = vld [vmem:[#allocation3] sm:$0xff]
        %v380 = vld [vmem:[#allocation3 + $0x8] sm:$0xff]
        %v381 = vld [vmem:[#allocation3 + $0x10] sm:$0xff]
        %v382 = vld [vmem:[#allocation3 + $0x18] sm:$0xff]
        %vm383 = vcmask 261120
        %v384 = vsel %vm383, %v365, -inf
        %385 = vmax.xlane.f32.xlu0 %v384
        %v386 = vpop.xlane.xlu0 %385
        %v387 = vsel %vm383, %v368, -inf
        %388 = vmax.xlane.f32.xlu0 %v387
        %v389 = vpop.xlane.xlu0 %388
        %v390 = vsel %vm383, %v373, -inf
        %391 = vmax.xlane.f32.xlu0 %v390
        %v392 = vpop.xlane.xlu0 %391
        %v393 = vsel %vm383, %v376, -inf
        %394 = vmax.xlane.f32.xlu0 %v393
        %v395 = vpop.xlane.xlu0 %394
        %v396 = vmax.f32 %v379, %v386
        %v397 = vmax.f32 %v380, %v389
        %v398 = vmax.f32 %v381, %v392
        %v399 = vmax.f32 %v382, %v395
        %v400 = vsub.f32 %v379, %v396
        %v401 = vsub.f32 %v380, %v397
        %v402 = vsub.f32 %v381, %v398
        %v403 = vsub.f32 %v382, %v399
        %v404 = vmul.f32 %v400, 1.442695
        %v405 = vpow.pop %v404
        %v406 = vmul.f32 %v401, 1.442695
        %v407 = vpow.pop %v406
        %v408 = vmul.f32 %v402, 1.442695
        %v409 = vpow.pop %v408
        %v410 = vmul.f32 %v403, 1.442695
        %v411 = vpow.pop %v410
        %v412 = vld [vmem:[#allocation4] sm:$0xff]
        %v413 = vld [vmem:[#allocation4 + $0x8] sm:$0xff]
        %v414 = vld [vmem:[#allocation4 + $0x10] sm:$0xff]
        %v415 = vld [vmem:[#allocation4 + $0x18] sm:$0xff]
        %v416 = vmul.f32 %v405, %v412
        %v417 = vmul.f32 %v407, %v413
        %v418 = vmul.f32 %v409, %v414
        %v419 = vmul.f32 %v411, %v415
        %421 = vset.pattern.permute.xlu0 0
        %422 = vperm.xlu0 %421, %v396
        %v423 = vpop.permute.xlu0 %422
        %426 = vset.pattern.permute.xlu0 0
        %427 = vperm.xlu0 %426, %v397
        %v428 = vpop.permute.xlu0 %427
        %431 = vset.pattern.permute.xlu0 0
        %432 = vperm.xlu0 %431, %v398
        %v433 = vpop.permute.xlu0 %432
        %436 = vset.pattern.permute.xlu0 0
        %437 = vperm.xlu0 %436, %v399
        %v438 = vpop.permute.xlu0 %437
        %v440 = vsub.f32 %v365, %v423
        %v441 = vsub.f32 %v368, %v428
        %v442 = vsub.f32 %v373, %v433
        %v443 = vsub.f32 %v376, %v438
        %v444 = vmul.f32 %v440, 1.442695
        %v445 = vpow.pop %v444
        %v446 = vmul.f32 %v441, 1.442695
        %v447 = vpow.pop %v446
        %v448 = vmul.f32 %v442, 1.442695
        %v449 = vpow.pop %v448
        %v450 = vmul.f32 %v443, 1.442695
        %v451 = vpow.pop %v450
        %v452 = vsel %vm383, %v445, 0.0
        %453 = vadd.xlane.f32.xlu0 %v452
        %v454 = vpop.xlane.xlu0 %453
        %v455 = vsel %vm383, %v447, 0.0
        %456 = vadd.xlane.f32.xlu0 %v455
        %v457 = vpop.xlane.xlu0 %456
        %v458 = vsel %vm383, %v449, 0.0
        %459 = vadd.xlane.f32.xlu0 %v458
        %v460 = vpop.xlane.xlu0 %459
        %v461 = vsel %vm383, %v451, 0.0
        %462 = vadd.xlane.f32.xlu0 %v461
        %v463 = vpop.xlane.xlu0 %462
        %v464 = vadd.f32 %v416, %v454
        %v465 = vadd.f32 %v417, %v457
        %v466 = vadd.f32 %v418, %v460
        %v467 = vadd.f32 %v419, %v463
        %vm468 = vcmask 7168
        %469 = vst.msk [vmem:[#allocation4] sm:$0xff] %vm468, %v464
        %470 = vst.msk [vmem:[#allocation4 + $0x8] sm:$0xff] %vm468, %v465
        %471 = vst.msk [vmem:[#allocation4 + $0x10] sm:$0xff] %vm468, %v466
        %472 = vst.msk [vmem:[#allocation4 + $0x18] sm:$0xff] %vm468, %v467
        %473 = vst.msk [vmem:[#allocation3] sm:$0xff] %vm468, %v396
        %474 = vst.msk [vmem:[#allocation3 + $0x8] sm:$0xff] %vm468, %v397
        %475 = vst.msk [vmem:[#allocation3 + $0x10] sm:$0xff] %vm468, %v398
        %476 = vst.msk [vmem:[#allocation3 + $0x18] sm:$0xff] %vm468, %v399
        %p477 = scmp.eq.s32.totalorder %s29, %s28
        // Predicated region
        $region41: #{tpu_custom_call.1} parent=27 // pred_check
          %p478 = pneg %p477
        $region42: #{tpu_custom_call.1} parent=27 // pred_check_branch
          %480 = sbr.rel (%p478) target = $region44
        $region43: #{tpu_custom_call.1} parent=27 // pred_region
          %v481 = vld [vmem:[#allocation2] sm:$0xff]
          %v482 = vld [vmem:[#allocation2 + $0x8] sm:$0xff]
          %v483 = vunpack.c.l.bf16 %v481
          %v484 = vunpack.c.h.bf16 %v481
          %v485 = vunpack.c.l.bf16 %v482
          %v486 = vunpack.c.h.bf16 %v482
          %v487 = vmul.f32 %v483, %v322
          %v488 = vmul.f32 %v484, %v323
          %v489 = vmul.f32 %v485, %v324
          %v490 = vmul.f32 %v486, %v325
          %491 = vadd.xlane.f32.xlu0 %v487
          %v492 = vpop.xlane.xlu0 %491
          %493 = vadd.xlane.f32.xlu0 %v488
          %v494 = vpop.xlane.xlu0 %493
          %495 = vadd.xlane.f32.xlu0 %v489
          %v496 = vpop.xlane.xlu0 %495
          %497 = vadd.xlane.f32.xlu0 %v490
          %v498 = vpop.xlane.xlu0 %497
          %499 = vst.msk [vmem:[#allocation5] sm:$0xff] %vm468, %v492
          %500 = vst.msk [vmem:[#allocation5 + $0x8] sm:$0xff] %vm468, %v494
          %501 = vst.msk [vmem:[#allocation5 + $0x10] sm:$0xff] %vm468, %v496
          %502 = vst.msk [vmem:[#allocation5 + $0x18] sm:$0xff] %vm468, %v498
        $region44: #{tpu_custom_call.1} parent=27 // pred_fallthru
          _
        %p503 = scmp.eq.s32.totalorder %s29, 3
        // Predicated region
        $region45: #{tpu_custom_call.1} parent=27 // pred_check
          %p504 = pneg %p503
        $region46: #{tpu_custom_call.1} parent=27 // pred_check_branch
          %506 = sbr.rel (%p504) target = $region48
        $region47: #{tpu_custom_call.1} parent=27 // pred_region
          %v507 = vld [vmem:[#allocation3] sm:$0xff]
          %v508 = vld [vmem:[#allocation3 + $0x8] sm:$0xff]
          %v509 = vld [vmem:[#allocation3 + $0x10] sm:$0xff]
          %v510 = vld [vmem:[#allocation3 + $0x18] sm:$0xff]
          %v511 = vld [vmem:[#allocation4] sm:$0xff]
          %v512 = vld [vmem:[#allocation4 + $0x8] sm:$0xff]
          %v513 = vld [vmem:[#allocation4 + $0x10] sm:$0xff]
          %v514 = vld [vmem:[#allocation4 + $0x18] sm:$0xff]
          %v515 = vlog2.pop %v511
          %v516 = vmul.f32 %v515, 0.6931472
          %v517 = vlog2.pop %v512
          %v518 = vmul.f32 %v517, 0.6931472
          %v519 = vlog2.pop %v513
          %v520 = vmul.f32 %v519, 0.6931472
          %v521 = vlog2.pop %v514
          %v522 = vmul.f32 %v521, 0.6931472
          %v523 = vadd.f32 %v507, %v516
          %v524 = vadd.f32 %v508, %v518
          %v525 = vadd.f32 %v509, %v520
          %v526 = vadd.f32 %v510, %v522
          %v527 = vld [vmem:[#allocation5] sm:$0xff]
          %v528 = vld [vmem:[#allocation5 + $0x8] sm:$0xff]
          %v529 = vld [vmem:[#allocation5 + $0x10] sm:$0xff]
          %v530 = vld [vmem:[#allocation5 + $0x18] sm:$0xff]
          %v531 = vsub.f32 %v523, %v527
          %v532 = vsub.f32 %v524, %v528
          %v533 = vsub.f32 %v525, %v529
          %v534 = vsub.f32 %v526, %v530
          %v535 = vsel %vm468, %v531, 0.0
          %v536 = vsel %vm468, %v532, 0.0
          %v537 = vadd.f32 %v535, %v536
          %v538 = vsel %vm468, %v533, 0.0
          %v539 = vadd.f32 %v537, %v538
          %v540 = vsel %vm468, %v534, 0.0
          %v541 = vadd.f32 %v539, %v540
          %542 = vadd.xlane.f32.xlu0 %v541
          %v543 = vpop.xlane.xlu0 %542
          %v544 = vrot.slane %v543, 4
          %v545 = vadd.f32 %v543, %v544
          %v546 = vrot.slane %v545, 2
          %v547 = vadd.f32 %v545, %v546
          %v548 = vrot.slane %v547, 1
          %v549 = vadd.f32 %v547, %v548
          %s550 = vtos %v549
          %v551 = vstv %s550
          %552 = vst [vmem:[%s236] sm:$0x1] %v551
        $region48: #{tpu_custom_call.1} parent=27 // pred_fallthru
          _
        %s553 = sand.u32 %s113, 1
        %s554 = scalar_lea.sflag [#allocation8], %s553
        %s555 = sand.u32 %s113, 1
        %s556 = scalar_lea.vmem [#allocation11], %s555
        // Predicated region
        $region49: #{tpu_custom_call.1} parent=27 // pred_check
          %p557 = pneg %p123
        $region50: #{tpu_custom_call.1} parent=27 // pred_check_branch
          %559 = sbr.rel (%p557) target = $region52
        $region51: #{tpu_custom_call.1} parent=27 // pred_region
          %s561 = ssub.s32 16, 16
          %562 = vsyncadd %s554, %s561
          %s563 = smul.addr %s27, 4
          %s564 = sadd.s32 %s28, %s563
          %s565 = smul.addr %s564, 16
          %s566 = scalar_lea.hbm %s2, %s565
          %s568 = sshll.u32 %s556, 4
          %s569 = int_to_ptr.vmem [resolvable:$true] %s568
          %571 = dma.vmem_to_hbm [thread:$0]  %s569, 16, %s566, %s554
        $region52: #{tpu_custom_call.1} parent=27 // pred_fallthru
          _
      $region28: #{tpu_custom_call.1} parent=5 // pred_fallthru
        _
      %p572 = scmp.le.s32.totalorder 2, %s17
      // Predicated region
      $region53: #{tpu_custom_call.1} parent=5 // pred_check
        %p573 = pneg %p572
      $region54: #{tpu_custom_call.1} parent=5 // pred_check_branch
        %575 = sbr.rel (%p573) target = $region56
      $region55: #{tpu_custom_call.1} parent=5 // pred_region
        %s576 = ssub.s32 %s17, 2
        // Predicated region
        $region57: #{tpu_custom_call.1} parent=55 // pred_check
          %p577 = pneg %p129
        $region58: #{tpu_custom_call.1} parent=55 // pred_check_branch
          %579 = sbr.rel (%p577) target = $region60
        $region59: #{tpu_custom_call.1} parent=55 // pred_region
          %s580 = sand.u32 %s114, 1
          %s581 = scalar_lea.sflag [#allocation8], %s580
          %s582 = sand.u32 %s114, 1
          %s583 = scalar_lea.vmem [#allocation11], %s582
          %584 = dma.done %s581, 16
        $region60: #{tpu_custom_call.1} parent=55 // pred_fallthru
          _
      $region56: #{tpu_custom_call.1} parent=5 // pred_fallthru
        _
    $region6: #{tpu_custom_call.1} parent=1 // loop_footer
      %s21 = sadd.s32 1, %s17
    $region7: #{tpu_custom_call.1} parent=1 // loop_footer_branch
      %16 = sbr.rel target = $region3
    $region8: #{tpu_custom_call.1} parent=1 // loop_exit
      _
    %585 = vsyncpa [#allocation7], 1
    %s586 = scalar_lea.sflag [#allocation7], 1
    %587 = vsyncpa %s586, 1
    %588 = vsyncpa [#allocation10], 1
    %s589 = scalar_lea.sflag [#allocation10], 1
    %590 = vsyncpa %s589, 1
    %591 = vsyncpa [#allocation8], 1
    %s592 = scalar_lea.sflag [#allocation8], 1
    %593 = vsyncpa %s592, 1

</llo_original>
